<compile_context>
chip_gen: v6e
topology: v6e:2x2x1
jax: 0.10.0
libtpu: 0.0.40
codegen_flags: <defaults>
</compile_context>

<pallas_src>
import functools

import numpy as np
import jax
import jax.numpy as jnp
from jax.experimental import pallas as pl
from jax.experimental.pallas import tpu as pltpu

NUM_FEATURES = 56        # config.num_of_features
NUM_CATEGORIES = 3       # self.num_categories


# ---------------------------------------------------------------------------
# Faithful forward: pure pass-through (zero work), matching the PyTorch module
# where forward() simply returns the parameter tensors themselves.
# ---------------------------------------------------------------------------
def gaussian_point_cloud_scene_forward(point_cloud, point_cloud_features):
    """GaussianPointCloudScene.forward(): identity pass-through of parameters."""
    return point_cloud, point_cloud_features


# ---------------------------------------------------------------------------
# Pallas path: materializing identity copy via direct HBM -> HBM async DMAs.
# One grid-free pallas_call, two DMAs, two DMA semaphores, no VMEM staging.
# ---------------------------------------------------------------------------
def _hbm_copy_kernel(pc_ref, feat_ref, pc_out_ref, feat_out_ref, dma_sems):
    # All four refs live in HBM (memory_space=pl.ANY).  Issue both full-tensor
    # contiguous copies, let them overlap, then wait.  One read + one write
    # per byte; no VMEM bounce, no grid-step overhead.
    cp_pc = pltpu.make_async_copy(pc_ref, pc_out_ref, dma_sems.at[0])
    cp_feat = pltpu.make_async_copy(feat_ref, feat_out_ref, dma_sems.at[1])
    cp_pc.start()
    cp_feat.start()
    cp_pc.wait()
    cp_feat.wait()


@jax.jit
def gaussian_point_cloud_scene_forward_pallas(point_cloud, point_cloud_features):
    """Identity forward producing fresh output buffers via HBM->HBM DMA.

    Inputs are left intact (not donated), so the parameters remain usable
    after forward(), matching the PyTorch module's semantics.
    """
    n, pc_dim = point_cloud.shape
    n2, feat_dim = point_cloud_features.shape
    assert n == n2 and pc_dim == 3 and feat_dim == NUM_FEATURES

    any_spec = pl.BlockSpec(memory_space=pl.ANY)
    return pl.pallas_call(
        _hbm_copy_kernel,
        out_shape=(
            jax.ShapeDtypeStruct((n, pc_dim), point_cloud.dtype),
            jax.ShapeDtypeStruct((n, feat_dim), point_cloud_features.dtype),
        ),
        in_specs=[any_spec, any_spec],
        out_specs=(any_spec, any_spec),
        scratch_shapes=[pltpu.SemaphoreType.DMA((2,))],
    )(point_cloud, point_cloud_features)


# ---------------------------------------------------------------------------
# Deterministic stand-in for GaussianPointCloudScene.__init__ (+ initialize()).
# ---------------------------------------------------------------------------
def build_scene_params(key, num_points):
    """Mirrors parameter shapes / dtypes of the PyTorch module:
      point_cloud          [N, 3]   float32
      point_cloud_features [N, 56]  float32
      _instance            [N, 3]   float32 zeros
      point_invalid_mask   [N]      int8 zeros
      point_object_id      [N]      int32 zeros
    """
    k_pc, k_quat = jax.random.split(key)
    point_cloud = jax.random.normal(k_pc, (num_points, 3), dtype=jnp.float32)

    feats = jnp.zeros((num_points, NUM_FEATURES), dtype=jnp.float32)
    # initialize(): random unit quaternion in [:, 0:4]
    quat = jax.random.uniform(k_quat, (num_points, 4), dtype=jnp.float32)
    quat = quat / jnp.linalg.norm(quat, axis=1, keepdims=True)
    feats = feats.at[:, 0:4].set(quat)
    # TODO(synk): cKDTree 3-nearest-neighbor distance estimate (host-side scipy)
    # has no clean Pallas equivalent; use a constant log-covariance instead.
    feats = feats.at[:, 4:7].set(jnp.log(jnp.float32(0.01)))
    feats = feats.at[:, 7].set(-2.0)   # initial_alpha
    feats = feats.at[:, 8].set(1.0)    # r SH dc
    feats = feats.at[:, 24].set(1.0)   # g SH dc
    feats = feats.at[:, 40].set(1.0)   # b SH dc

    instance = jnp.zeros((num_points, NUM_CATEGORIES), dtype=jnp.float32)
    point_invalid_mask = jnp.zeros((num_points,), dtype=jnp.int8)
    point_object_id = jnp.zeros((num_points,), dtype=jnp.int32)
    return point_cloud, feats, instance, point_invalid_mask, point_object_id


if __name__ == "__main__":
    key = jax.random.PRNGKey(0)
    N = 512  # small demo size; the kernel handles arbitrary N (no padding)

    (point_cloud, point_cloud_features,
     _instance, point_invalid_mask, point_object_id) = build_scene_params(key, N)
    jax.block_until_ready((point_cloud, point_cloud_features))

    expected_pc = np.asarray(point_cloud)
    expected_feat = np.asarray(point_cloud_features)

    # Pallas HBM->HBM copy path: fresh output buffers, inputs untouched.
    out_pc, out_feat = gaussian_point_cloud_scene_forward_pallas(
        point_cloud, point_cloud_features)
    jax.block_until_ready((out_pc, out_feat))

    # Pure pass-through forward (semantically identical to the PyTorch module).
    same_pc, same_feat = gaussian_point_cloud_scene_forward(
        point_cloud, point_cloud_features)
    jax.block_until_ready((same_pc, same_feat))

    assert out_pc.shape == (N, 3) and out_pc.dtype == jnp.float32
    assert out_feat.shape == (N, NUM_FEATURES) and out_feat.dtype == jnp.float32
    assert np.array_equal(np.asarray(out_pc), expected_pc)
    assert np.array_equal(np.asarray(out_feat), expected_feat)
    assert np.array_equal(np.asarray(same_pc), expected_pc)
    assert np.array_equal(np.asarray(same_feat), expected_feat)

    print("KERNEL_OK")
</pallas_src>

<mosaic_0001>
module attributes {stable_mosaic.version = 11 : i64} {
  func.func @_hbm_copy_kernel(%arg0: memref<512x3xf32, #tpu.memory_space<any>>, %arg1: memref<512x56xf32, #tpu.memory_space<any>>, %arg2: memref<512x3xf32, #tpu.memory_space<any>>, %arg3: memref<512x56xf32, #tpu.memory_space<any>>, %arg4: memref<2x!tpu.dma_semaphore, #tpu.memory_space<semaphore_mem>>) attributes {dimension_semantics = [], scalar_prefetch = 0 : i64, scratch_operands = 1 : i64, tpu.core_type = #tpu.core_type<tc>} {
    %c0_i32 = arith.constant 0 : i32
    %0 = tpu.memref_slice %arg4[%c0_i32] : memref<2x!tpu.dma_semaphore, #tpu.memory_space<semaphore_mem>> -> memref<1x!tpu.dma_semaphore, #tpu.memory_space<semaphore_mem>>
    %1 = tpu.memref_squeeze %0 : memref<1x!tpu.dma_semaphore, #tpu.memory_space<semaphore_mem>> -> memref<!tpu.dma_semaphore, #tpu.memory_space<semaphore_mem>>
    tpu.enqueue_dma source(%arg0 : memref<512x3xf32, #tpu.memory_space<any>>) target(%arg2 : memref<512x3xf32, #tpu.memory_space<any>>) target_semaphore(%1 : memref<!tpu.dma_semaphore, #tpu.memory_space<semaphore_mem>>)
    %c1_i32 = arith.constant 1 : i32
    %2 = tpu.memref_slice %arg4[%c1_i32] : memref<2x!tpu.dma_semaphore, #tpu.memory_space<semaphore_mem>> -> memref<1x!tpu.dma_semaphore, #tpu.memory_space<semaphore_mem>>
    %3 = tpu.memref_squeeze %2 : memref<1x!tpu.dma_semaphore, #tpu.memory_space<semaphore_mem>> -> memref<!tpu.dma_semaphore, #tpu.memory_space<semaphore_mem>>
    tpu.enqueue_dma source(%arg1 : memref<512x56xf32, #tpu.memory_space<any>>) target(%arg3 : memref<512x56xf32, #tpu.memory_space<any>>) target_semaphore(%3 : memref<!tpu.dma_semaphore, #tpu.memory_space<semaphore_mem>>)
    %c0_i32_0 = arith.constant 0 : i32
    %4 = tpu.memref_slice %arg4[%c0_i32_0] : memref<2x!tpu.dma_semaphore, #tpu.memory_space<semaphore_mem>> -> memref<1x!tpu.dma_semaphore, #tpu.memory_space<semaphore_mem>>
    %5 = tpu.memref_squeeze %4 : memref<1x!tpu.dma_semaphore, #tpu.memory_space<semaphore_mem>> -> memref<!tpu.dma_semaphore, #tpu.memory_space<semaphore_mem>>
    tpu.wait_dma2 semaphore(%5 : memref<!tpu.dma_semaphore, #tpu.memory_space<semaphore_mem>>) src(%arg0 : memref<512x3xf32, #tpu.memory_space<any>>) dst(%arg2 : memref<512x3xf32, #tpu.memory_space<any>>)
    %c1_i32_1 = arith.constant 1 : i32
    %6 = tpu.memref_slice %arg4[%c1_i32_1] : memref<2x!tpu.dma_semaphore, #tpu.memory_space<semaphore_mem>> -> memref<1x!tpu.dma_semaphore, #tpu.memory_space<semaphore_mem>>
    %7 = tpu.memref_squeeze %6 : memref<1x!tpu.dma_semaphore, #tpu.memory_space<semaphore_mem>> -> memref<!tpu.dma_semaphore, #tpu.memory_space<semaphore_mem>>
    tpu.wait_dma2 semaphore(%7 : memref<!tpu.dma_semaphore, #tpu.memory_space<semaphore_mem>>) src(%arg1 : memref<512x56xf32, #tpu.memory_space<any>>) dst(%arg3 : memref<512x56xf32, #tpu.memory_space<any>>)
    return
  }
}

</mosaic_0001>

<llo_original>
// kernel: gaussian_point_cloud_scene_forward_pallas.1
$region0: #{gaussian_point_cloud_scene_forward_pallas.1}
  #allocation0 [shape = 'u32[]', space=smem, size = 0x4, offset = 0x4, fixed_abs, tag = 'smem constant byte address 0x4 - core index']
  #allocation1 [shape = 'u32[144,128]{1,0:T(1,128)}', space=vmem, size = 0x12000, scoped, tag = 'internal scratch']
  #allocation2 [shape = 's32[2]{0}', space=sflag, size = 0x8, scoped, tag = 'scratch operand']
  #allocation3 [shape = 's32[]', space=sflag, size = 0x4, offset = 0, fixed_abs, tag = 'sflag constant byte address 0x0 - dummy sync flag']
  #allocation4 [shape = 's32[]', space=sflag, size = 0x4, offset = 0, fixed_abs, tag = 'sflag constant byte address 0x0 - dummy sync flag']
  %s0 = inlined_call_operand.vmem [shape: f32[512,3], index: 0, kind: input, shape index: {}]
  %s1 = inlined_call_operand.vmem [shape: f32[512,56], index: 1, kind: input, shape index: {}]
  %s2 = inlined_call_operand.vmem [shape: f32[512,3], index: 2, kind: output, shape index: {0}]
  %s3 = inlined_call_operand.vmem [shape: f32[512,56], index: 3, kind: output, shape index: {1}]
  %4 = xla_tuple %s2, %s3
  %s5 = sld [smem:[#allocation0]]
  $region70: #{gaussian_point_cloud_scene_forward_pallas.1} parent=0
    _
  %s7 = ssub.s32 1, %s5
  %s8 = scalar_select 0, %s7, %s5
  %p10 = scmp.lt.u32.totalorder 512, 8
  %p11 = pneg %p10
  // Predicated region
  $region2: #{gaussian_point_cloud_scene_forward_pallas.1} parent=0 // pred_check
    _
  $region3: #{gaussian_point_cloud_scene_forward_pallas.1} parent=0 // pred_check_branch
    %13 = sbr.rel (%p10) target = $region5
  $region4: #{gaussian_point_cloud_scene_forward_pallas.1} parent=0 // pred_region
    %s29 = sand.u32 512, 7
    %p30 = scmp.eq.s32.totalorder %s29, 0
    // Predicated region
    $region17: #{gaussian_point_cloud_scene_forward_pallas.1} parent=4 // pred_check
      %p31 = pneg %p30
    $region18: #{gaussian_point_cloud_scene_forward_pallas.1} parent=4 // pred_check_branch
      %33 = sbr.rel (%p31) target = $region20
    $region19: #{gaussian_point_cloud_scene_forward_pallas.1} parent=4 // pred_region
      loop: start=0, step=1, limit=1
      $region21: #{gaussian_point_cloud_scene_forward_pallas.1} parent=19 // loop_pre_header
        _
      $region22: #{gaussian_point_cloud_scene_forward_pallas.1} parent=19 // loop_header
        %s35 = sphi 0, %s39
        %p36 = scmp.ge.s32.totalorder %s35, 1
        %s40 = sphi %s0, %s0
        %s41 = sphi %s2, %s2
      $region23: #{gaussian_point_cloud_scene_forward_pallas.1} parent=19 // loop_header_branch
        %38 = sbr.rel (%p36) target = $region27
      $region24: #{gaussian_point_cloud_scene_forward_pallas.1} parent=19 // loop_body
        %v42 = vld [vmem:[%s40] sm:$0xff]
        %43 = vst [vmem:[%s41] sm:$0xff] %v42
        %v44 = vld [vmem:[%s40 + $0x8] sm:$0xff]
        %45 = vst [vmem:[%s41 + $0x8] sm:$0xff] %v44
        %v46 = vld [vmem:[%s40 + $0x10] sm:$0xff]
        %47 = vst [vmem:[%s41 + $0x10] sm:$0xff] %v46
        %v48 = vld [vmem:[%s40 + $0x18] sm:$0xff]
        %49 = vst [vmem:[%s41 + $0x18] sm:$0xff] %v48
        %v50 = vld [vmem:[%s40 + $0x20] sm:$0xff]
        %51 = vst [vmem:[%s41 + $0x20] sm:$0xff] %v50
        %v52 = vld [vmem:[%s40 + $0x28] sm:$0xff]
        %53 = vst [vmem:[%s41 + $0x28] sm:$0xff] %v52
        %v54 = vld [vmem:[%s40 + $0x30] sm:$0xff]
        %55 = vst [vmem:[%s41 + $0x30] sm:$0xff] %v54
        %v56 = vld [vmem:[%s40 + $0x38] sm:$0xff]
        %57 = vst [vmem:[%s41 + $0x38] sm:$0xff] %v56
        %v58 = vld [vmem:[%s40 + $0x40] sm:$0xff]
        %59 = vst [vmem:[%s41 + $0x40] sm:$0xff] %v58
        %v60 = vld [vmem:[%s40 + $0x48] sm:$0xff]
        %61 = vst [vmem:[%s41 + $0x48] sm:$0xff] %v60
        %v62 = vld [vmem:[%s40 + $0x50] sm:$0xff]
        %63 = vst [vmem:[%s41 + $0x50] sm:$0xff] %v62
        %v64 = vld [vmem:[%s40 + $0x58] sm:$0xff]
        %65 = vst [vmem:[%s41 + $0x58] sm:$0xff] %v64
        %v66 = vld [vmem:[%s40 + $0x60] sm:$0xff]
        %67 = vst [vmem:[%s41 + $0x60] sm:$0xff] %v66
        %v68 = vld [vmem:[%s40 + $0x68] sm:$0xff]
        %69 = vst [vmem:[%s41 + $0x68] sm:$0xff] %v68
        %v70 = vld [vmem:[%s40 + $0x70] sm:$0xff]
        %71 = vst [vmem:[%s41 + $0x70] sm:$0xff] %v70
        %v72 = vld [vmem:[%s40 + $0x78] sm:$0xff]
        %73 = vst [vmem:[%s41 + $0x78] sm:$0xff] %v72
        %v74 = vld [vmem:[%s40 + $0x80] sm:$0xff]
        %75 = vst [vmem:[%s41 + $0x80] sm:$0xff] %v74
        %v76 = vld [vmem:[%s40 + $0x88] sm:$0xff]
        %77 = vst [vmem:[%s41 + $0x88] sm:$0xff] %v76
        %v78 = vld [vmem:[%s40 + $0x90] sm:$0xff]
        %79 = vst [vmem:[%s41 + $0x90] sm:$0xff] %v78
        %v80 = vld [vmem:[%s40 + $0x98] sm:$0xff]
        %81 = vst [vmem:[%s41 + $0x98] sm:$0xff] %v80
        %v82 = vld [vmem:[%s40 + $0xa0] sm:$0xff]
        %83 = vst [vmem:[%s41 + $0xa0] sm:$0xff] %v82
        %v84 = vld [vmem:[%s40 + $0xa8] sm:$0xff]
        %85 = vst [vmem:[%s41 + $0xa8] sm:$0xff] %v84
        %v86 = vld [vmem:[%s40 + $0xb0] sm:$0xff]
        %87 = vst [vmem:[%s41 + $0xb0] sm:$0xff] %v86
        %v88 = vld [vmem:[%s40 + $0xb8] sm:$0xff]
        %89 = vst [vmem:[%s41 + $0xb8] sm:$0xff] %v88
        %v90 = vld [vmem:[%s40 + $0xc0] sm:$0xff]
        %91 = vst [vmem:[%s41 + $0xc0] sm:$0xff] %v90
        %v92 = vld [vmem:[%s40 + $0xc8] sm:$0xff]
        %93 = vst [vmem:[%s41 + $0xc8] sm:$0xff] %v92
        %v94 = vld [vmem:[%s40 + $0xd0] sm:$0xff]
        %95 = vst [vmem:[%s41 + $0xd0] sm:$0xff] %v94
        %v96 = vld [vmem:[%s40 + $0xd8] sm:$0xff]
        %97 = vst [vmem:[%s41 + $0xd8] sm:$0xff] %v96
        %v98 = vld [vmem:[%s40 + $0xe0] sm:$0xff]
        %99 = vst [vmem:[%s41 + $0xe0] sm:$0xff] %v98
        %v100 = vld [vmem:[%s40 + $0xe8] sm:$0xff]
        %101 = vst [vmem:[%s41 + $0xe8] sm:$0xff] %v100
        %v102 = vld [vmem:[%s40 + $0xf0] sm:$0xff]
        %103 = vst [vmem:[%s41 + $0xf0] sm:$0xff] %v102
        %v104 = vld [vmem:[%s40 + $0xf8] sm:$0xff]
        %105 = vst [vmem:[%s41 + $0xf8] sm:$0xff] %v104
        %v106 = vld [vmem:[%s40 + $0x100] sm:$0xff]
        %107 = vst [vmem:[%s41 + $0x100] sm:$0xff] %v106
        %v108 = vld [vmem:[%s40 + $0x108] sm:$0xff]
        %109 = vst [vmem:[%s41 + $0x108] sm:$0xff] %v108
        %v110 = vld [vmem:[%s40 + $0x110] sm:$0xff]
        %111 = vst [vmem:[%s41 + $0x110] sm:$0xff] %v110
        %v112 = vld [vmem:[%s40 + $0x118] sm:$0xff]
        %113 = vst [vmem:[%s41 + $0x118] sm:$0xff] %v112
        %v114 = vld [vmem:[%s40 + $0x120] sm:$0xff]
        %115 = vst [vmem:[%s41 + $0x120] sm:$0xff] %v114
        %v116 = vld [vmem:[%s40 + $0x128] sm:$0xff]
        %117 = vst [vmem:[%s41 + $0x128] sm:$0xff] %v116
        %v118 = vld [vmem:[%s40 + $0x130] sm:$0xff]
        %119 = vst [vmem:[%s41 + $0x130] sm:$0xff] %v118
        %v120 = vld [vmem:[%s40 + $0x138] sm:$0xff]
        %121 = vst [vmem:[%s41 + $0x138] sm:$0xff] %v120
        %v122 = vld [vmem:[%s40 + $0x140] sm:$0xff]
        %123 = vst [vmem:[%s41 + $0x140] sm:$0xff] %v122
        %v124 = vld [vmem:[%s40 + $0x148] sm:$0xff]
        %125 = vst [vmem:[%s41 + $0x148] sm:$0xff] %v124
        %v126 = vld [vmem:[%s40 + $0x150] sm:$0xff]
        %127 = vst [vmem:[%s41 + $0x150] sm:$0xff] %v126
        %v128 = vld [vmem:[%s40 + $0x158] sm:$0xff]
        %129 = vst [vmem:[%s41 + $0x158] sm:$0xff] %v128
        %v130 = vld [vmem:[%s40 + $0x160] sm:$0xff]
        %131 = vst [vmem:[%s41 + $0x160] sm:$0xff] %v130
        %v132 = vld [vmem:[%s40 + $0x168] sm:$0xff]
        %133 = vst [vmem:[%s41 + $0x168] sm:$0xff] %v132
        %v134 = vld [vmem:[%s40 + $0x170] sm:$0xff]
        %135 = vst [vmem:[%s41 + $0x170] sm:$0xff] %v134
        %v136 = vld [vmem:[%s40 + $0x178] sm:$0xff]
        %137 = vst [vmem:[%s41 + $0x178] sm:$0xff] %v136
        %v138 = vld [vmem:[%s40 + $0x180] sm:$0xff]
        %139 = vst [vmem:[%s41 + $0x180] sm:$0xff] %v138
        %v140 = vld [vmem:[%s40 + $0x188] sm:$0xff]
        %141 = vst [vmem:[%s41 + $0x188] sm:$0xff] %v140
        %v142 = vld [vmem:[%s40 + $0x190] sm:$0xff]
        %143 = vst [vmem:[%s41 + $0x190] sm:$0xff] %v142
        %v144 = vld [vmem:[%s40 + $0x198] sm:$0xff]
        %145 = vst [vmem:[%s41 + $0x198] sm:$0xff] %v144
        %v146 = vld [vmem:[%s40 + $0x1a0] sm:$0xff]
        %147 = vst [vmem:[%s41 + $0x1a0] sm:$0xff] %v146
        %v148 = vld [vmem:[%s40 + $0x1a8] sm:$0xff]
        %149 = vst [vmem:[%s41 + $0x1a8] sm:$0xff] %v148
        %v150 = vld [vmem:[%s40 + $0x1b0] sm:$0xff]
        %151 = vst [vmem:[%s41 + $0x1b0] sm:$0xff] %v150
        %v152 = vld [vmem:[%s40 + $0x1b8] sm:$0xff]
        %153 = vst [vmem:[%s41 + $0x1b8] sm:$0xff] %v152
        %v154 = vld [vmem:[%s40 + $0x1c0] sm:$0xff]
        %155 = vst [vmem:[%s41 + $0x1c0] sm:$0xff] %v154
        %v156 = vld [vmem:[%s40 + $0x1c8] sm:$0xff]
        %157 = vst [vmem:[%s41 + $0x1c8] sm:$0xff] %v156
        %v158 = vld [vmem:[%s40 + $0x1d0] sm:$0xff]
        %159 = vst [vmem:[%s41 + $0x1d0] sm:$0xff] %v158
        %v160 = vld [vmem:[%s40 + $0x1d8] sm:$0xff]
        %161 = vst [vmem:[%s41 + $0x1d8] sm:$0xff] %v160
        %v162 = vld [vmem:[%s40 + $0x1e0] sm:$0xff]
        %163 = vst [vmem:[%s41 + $0x1e0] sm:$0xff] %v162
        %v164 = vld [vmem:[%s40 + $0x1e8] sm:$0xff]
        %165 = vst [vmem:[%s41 + $0x1e8] sm:$0xff] %v164
        %v166 = vld [vmem:[%s40 + $0x1f0] sm:$0xff]
        %167 = vst [vmem:[%s41 + $0x1f0] sm:$0xff] %v166
        %v168 = vld [vmem:[%s40 + $0x1f8] sm:$0xff]
        %169 = vst [vmem:[%s41 + $0x1f8] sm:$0xff] %v168
      $region25: #{gaussian_point_cloud_scene_forward_pallas.1} parent=19 // loop_footer
        %s39 = sadd.s32 1, %s35
      $region26: #{gaussian_point_cloud_scene_forward_pallas.1} parent=19 // loop_footer_branch
        %34 = sbr.rel target = $region22
      $region27: #{gaussian_point_cloud_scene_forward_pallas.1} parent=19 // loop_exit
        _
    $region20: #{gaussian_point_cloud_scene_forward_pallas.1} parent=4 // pred_fallthru
      _
    %p170 = pneg %p30
    // Predicated region
    $region28: #{gaussian_point_cloud_scene_forward_pallas.1} parent=4 // pred_check
      _
    $region29: #{gaussian_point_cloud_scene_forward_pallas.1} parent=4 // pred_check_branch
      %172 = sbr.rel (%p30) target = $region31
    $region30: #{gaussian_point_cloud_scene_forward_pallas.1} parent=4 // pred_region
      %s173 = sand.u32 512, 7
    $region31: #{gaussian_point_cloud_scene_forward_pallas.1} parent=4 // pred_fallthru
      _
  $region5: #{gaussian_point_cloud_scene_forward_pallas.1} parent=0 // pred_fallthru
    _
  // Predicated region
  $region6: #{gaussian_point_cloud_scene_forward_pallas.1} parent=0 // pred_check
    %p14 = pneg %p10
  $region7: #{gaussian_point_cloud_scene_forward_pallas.1} parent=0 // pred_check_branch
    %16 = sbr.rel (%p14) target = $region9
  $region8: #{gaussian_point_cloud_scene_forward_pallas.1} parent=0 // pred_region
    %s17 = sshll.u32 1, 512
    %s18 = ssub.s32 %s17, 1
    loop: start=0, step=1, limit=1
    $region10: #{gaussian_point_cloud_scene_forward_pallas.1} parent=8 // loop_pre_header
      _
    $region11: #{gaussian_point_cloud_scene_forward_pallas.1} parent=8 // loop_header
      %s20 = sphi 0, %s24
      %p21 = scmp.ge.s32.totalorder %s20, 1
      %s25 = sphi %s0, %s0
      %s26 = sphi %s2, %s2
    $region12: #{gaussian_point_cloud_scene_forward_pallas.1} parent=8 // loop_header_branch
      %23 = sbr.rel (%p21) target = $region16
    $region13: #{gaussian_point_cloud_scene_forward_pallas.1} parent=8 // loop_body
      %v27 = vld [vmem:[%s25] sm:%s18]
      %28 = vst [vmem:[%s26] sm:%s18] %v27
    $region14: #{gaussian_point_cloud_scene_forward_pallas.1} parent=8 // loop_footer
      %s24 = sadd.s32 1, %s20
    $region15: #{gaussian_point_cloud_scene_forward_pallas.1} parent=8 // loop_footer_branch
      %19 = sbr.rel target = $region11
    $region16: #{gaussian_point_cloud_scene_forward_pallas.1} parent=8 // loop_exit
      _
  $region9: #{gaussian_point_cloud_scene_forward_pallas.1} parent=0 // pred_fallthru
    _
  // Predicated region
  $region32: #{gaussian_point_cloud_scene_forward_pallas.1} parent=0 // pred_check
    _
  $region33: #{gaussian_point_cloud_scene_forward_pallas.1} parent=0 // pred_check_branch
    %176 = sbr.rel (0) target = $region35
  $region34: #{gaussian_point_cloud_scene_forward_pallas.1} parent=0 // pred_region
    %177 = vsyncadd [#allocation2], 8192
  $region35: #{gaussian_point_cloud_scene_forward_pallas.1} parent=0 // pred_fallthru
    _
  %s178 = scalar_lea.sflag [#allocation2], 1
  %p180 = scmp.lt.u32.totalorder 512, 8
  %p181 = pneg %p180
  // Predicated region
  $region36: #{gaussian_point_cloud_scene_forward_pallas.1} parent=0 // pred_check
    _
  $region37: #{gaussian_point_cloud_scene_forward_pallas.1} parent=0 // pred_check_branch
    %183 = sbr.rel (%p180) target = $region39
  $region38: #{gaussian_point_cloud_scene_forward_pallas.1} parent=0 // pred_region
    %s199 = sand.u32 512, 7
    %p200 = scmp.eq.s32.totalorder %s199, 0
    // Predicated region
    $region51: #{gaussian_point_cloud_scene_forward_pallas.1} parent=38 // pred_check
      %p201 = pneg %p200
    $region52: #{gaussian_point_cloud_scene_forward_pallas.1} parent=38 // pred_check_branch
      %203 = sbr.rel (%p201) target = $region54
    $region53: #{gaussian_point_cloud_scene_forward_pallas.1} parent=38 // pred_region
      loop: start=0, step=1, limit=1
      $region55: #{gaussian_point_cloud_scene_forward_pallas.1} parent=53 // loop_pre_header
        _
      $region56: #{gaussian_point_cloud_scene_forward_pallas.1} parent=53 // loop_header
        %s205 = sphi 0, %s209
        %p206 = scmp.ge.s32.totalorder %s205, 1
        %s210 = sphi %s1, %s1
        %s211 = sphi %s3, %s3
      $region57: #{gaussian_point_cloud_scene_forward_pallas.1} parent=53 // loop_header_branch
        %208 = sbr.rel (%p206) target = $region61
      $region58: #{gaussian_point_cloud_scene_forward_pallas.1} parent=53 // loop_body
        %v212 = vld [vmem:[%s210] sm:$0xff]
        %213 = vst [vmem:[%s211] sm:$0xff] %v212
        %v214 = vld [vmem:[%s210 + $0x8] sm:$0xff]
        %215 = vst [vmem:[%s211 + $0x8] sm:$0xff] %v214
        %v216 = vld [vmem:[%s210 + $0x10] sm:$0xff]
        %217 = vst [vmem:[%s211 + $0x10] sm:$0xff] %v216
        %v218 = vld [vmem:[%s210 + $0x18] sm:$0xff]
        %219 = vst [vmem:[%s211 + $0x18] sm:$0xff] %v218
        %v220 = vld [vmem:[%s210 + $0x20] sm:$0xff]
        %221 = vst [vmem:[%s211 + $0x20] sm:$0xff] %v220
        %v222 = vld [vmem:[%s210 + $0x28] sm:$0xff]
        %223 = vst [vmem:[%s211 + $0x28] sm:$0xff] %v222
        %v224 = vld [vmem:[%s210 + $0x30] sm:$0xff]
        %225 = vst [vmem:[%s211 + $0x30] sm:$0xff] %v224
        %v226 = vld [vmem:[%s210 + $0x38] sm:$0xff]
        %227 = vst [vmem:[%s211 + $0x38] sm:$0xff] %v226
        %v228 = vld [vmem:[%s210 + $0x40] sm:$0xff]
        %229 = vst [vmem:[%s211 + $0x40] sm:$0xff] %v228
        %v230 = vld [vmem:[%s210 + $0x48] sm:$0xff]
        %231 = vst [vmem:[%s211 + $0x48] sm:$0xff] %v230
        %v232 = vld [vmem:[%s210 + $0x50] sm:$0xff]
        %233 = vst [vmem:[%s211 + $0x50] sm:$0xff] %v232
        %v234 = vld [vmem:[%s210 + $0x58] sm:$0xff]
        %235 = vst [vmem:[%s211 + $0x58] sm:$0xff] %v234
        %v236 = vld [vmem:[%s210 + $0x60] sm:$0xff]
        %237 = vst [vmem:[%s211 + $0x60] sm:$0xff] %v236
        %v238 = vld [vmem:[%s210 + $0x68] sm:$0xff]
        %239 = vst [vmem:[%s211 + $0x68] sm:$0xff] %v238
        %v240 = vld [vmem:[%s210 + $0x70] sm:$0xff]
        %241 = vst [vmem:[%s211 + $0x70] sm:$0xff] %v240
        %v242 = vld [vmem:[%s210 + $0x78] sm:$0xff]
        %243 = vst [vmem:[%s211 + $0x78] sm:$0xff] %v242
        %v244 = vld [vmem:[%s210 + $0x80] sm:$0xff]
        %245 = vst [vmem:[%s211 + $0x80] sm:$0xff] %v244
        %v246 = vld [vmem:[%s210 + $0x88] sm:$0xff]
        %247 = vst [vmem:[%s211 + $0x88] sm:$0xff] %v246
        %v248 = vld [vmem:[%s210 + $0x90] sm:$0xff]
        %249 = vst [vmem:[%s211 + $0x90] sm:$0xff] %v248
        %v250 = vld [vmem:[%s210 + $0x98] sm:$0xff]
        %251 = vst [vmem:[%s211 + $0x98] sm:$0xff] %v250
        %v252 = vld [vmem:[%s210 + $0xa0] sm:$0xff]
        %253 = vst [vmem:[%s211 + $0xa0] sm:$0xff] %v252
        %v254 = vld [vmem:[%s210 + $0xa8] sm:$0xff]
        %255 = vst [vmem:[%s211 + $0xa8] sm:$0xff] %v254
        %v256 = vld [vmem:[%s210 + $0xb0] sm:$0xff]
        %257 = vst [vmem:[%s211 + $0xb0] sm:$0xff] %v256
        %v258 = vld [vmem:[%s210 + $0xb8] sm:$0xff]
        %259 = vst [vmem:[%s211 + $0xb8] sm:$0xff] %v258
        %v260 = vld [vmem:[%s210 + $0xc0] sm:$0xff]
        %261 = vst [vmem:[%s211 + $0xc0] sm:$0xff] %v260
        %v262 = vld [vmem:[%s210 + $0xc8] sm:$0xff]
        %263 = vst [vmem:[%s211 + $0xc8] sm:$0xff] %v262
        %v264 = vld [vmem:[%s210 + $0xd0] sm:$0xff]
        %265 = vst [vmem:[%s211 + $0xd0] sm:$0xff] %v264
        %v266 = vld [vmem:[%s210 + $0xd8] sm:$0xff]
        %267 = vst [vmem:[%s211 + $0xd8] sm:$0xff] %v266
        %v268 = vld [vmem:[%s210 + $0xe0] sm:$0xff]
        %269 = vst [vmem:[%s211 + $0xe0] sm:$0xff] %v268
        %v270 = vld [vmem:[%s210 + $0xe8] sm:$0xff]
        %271 = vst [vmem:[%s211 + $0xe8] sm:$0xff] %v270
        %v272 = vld [vmem:[%s210 + $0xf0] sm:$0xff]
        %273 = vst [vmem:[%s211 + $0xf0] sm:$0xff] %v272
        %v274 = vld [vmem:[%s210 + $0xf8] sm:$0xff]
        %275 = vst [vmem:[%s211 + $0xf8] sm:$0xff] %v274
        %v276 = vld [vmem:[%s210 + $0x100] sm:$0xff]
        %277 = vst [vmem:[%s211 + $0x100] sm:$0xff] %v276
        %v278 = vld [vmem:[%s210 + $0x108] sm:$0xff]
        %279 = vst [vmem:[%s211 + $0x108] sm:$0xff] %v278
        %v280 = vld [vmem:[%s210 + $0x110] sm:$0xff]
        %281 = vst [vmem:[%s211 + $0x110] sm:$0xff] %v280
        %v282 = vld [vmem:[%s210 + $0x118] sm:$0xff]
        %283 = vst [vmem:[%s211 + $0x118] sm:$0xff] %v282
        %v284 = vld [vmem:[%s210 + $0x120] sm:$0xff]
        %285 = vst [vmem:[%s211 + $0x120] sm:$0xff] %v284
        %v286 = vld [vmem:[%s210 + $0x128] sm:$0xff]
        %287 = vst [vmem:[%s211 + $0x128] sm:$0xff] %v286
        %v288 = vld [vmem:[%s210 + $0x130] sm:$0xff]
        %289 = vst [vmem:[%s211 + $0x130] sm:$0xff] %v288
        %v290 = vld [vmem:[%s210 + $0x138] sm:$0xff]
        %291 = vst [vmem:[%s211 + $0x138] sm:$0xff] %v290
        %v292 = vld [vmem:[%s210 + $0x140] sm:$0xff]
        %293 = vst [vmem:[%s211 + $0x140] sm:$0xff] %v292
        %v294 = vld [vmem:[%s210 + $0x148] sm:$0xff]
        %295 = vst [vmem:[%s211 + $0x148] sm:$0xff] %v294
        %v296 = vld [vmem:[%s210 + $0x150] sm:$0xff]
        %297 = vst [vmem:[%s211 + $0x150] sm:$0xff] %v296
        %v298 = vld [vmem:[%s210 + $0x158] sm:$0xff]
        %299 = vst [vmem:[%s211 + $0x158] sm:$0xff] %v298
        %v300 = vld [vmem:[%s210 + $0x160] sm:$0xff]
        %301 = vst [vmem:[%s211 + $0x160] sm:$0xff] %v300
        %v302 = vld [vmem:[%s210 + $0x168] sm:$0xff]
        %303 = vst [vmem:[%s211 + $0x168] sm:$0xff] %v302
        %v304 = vld [vmem:[%s210 + $0x170] sm:$0xff]
        %305 = vst [vmem:[%s211 + $0x170] sm:$0xff] %v304
        %v306 = vld [vmem:[%s210 + $0x178] sm:$0xff]
        %307 = vst [vmem:[%s211 + $0x178] sm:$0xff] %v306
        %v308 = vld [vmem:[%s210 + $0x180] sm:$0xff]
        %309 = vst [vmem:[%s211 + $0x180] sm:$0xff] %v308
        %v310 = vld [vmem:[%s210 + $0x188] sm:$0xff]
        %311 = vst [vmem:[%s211 + $0x188] sm:$0xff] %v310
        %v312 = vld [vmem:[%s210 + $0x190] sm:$0xff]
        %313 = vst [vmem:[%s211 + $0x190] sm:$0xff] %v312
        %v314 = vld [vmem:[%s210 + $0x198] sm:$0xff]
        %315 = vst [vmem:[%s211 + $0x198] sm:$0xff] %v314
        %v316 = vld [vmem:[%s210 + $0x1a0] sm:$0xff]
        %317 = vst [vmem:[%s211 + $0x1a0] sm:$0xff] %v316
        %v318 = vld [vmem:[%s210 + $0x1a8] sm:$0xff]
        %319 = vst [vmem:[%s211 + $0x1a8] sm:$0xff] %v318
        %v320 = vld [vmem:[%s210 + $0x1b0] sm:$0xff]
        %321 = vst [vmem:[%s211 + $0x1b0] sm:$0xff] %v320
        %v322 = vld [vmem:[%s210 + $0x1b8] sm:$0xff]
        %323 = vst [vmem:[%s211 + $0x1b8] sm:$0xff] %v322
        %v324 = vld [vmem:[%s210 + $0x1c0] sm:$0xff]
        %325 = vst [vmem:[%s211 + $0x1c0] sm:$0xff] %v324
        %v326 = vld [vmem:[%s210 + $0x1c8] sm:$0xff]
        %327 = vst [vmem:[%s211 + $0x1c8] sm:$0xff] %v326
        %v328 = vld [vmem:[%s210 + $0x1d0] sm:$0xff]
        %329 = vst [vmem:[%s211 + $0x1d0] sm:$0xff] %v328
        %v330 = vld [vmem:[%s210 + $0x1d8] sm:$0xff]
        %331 = vst [vmem:[%s211 + $0x1d8] sm:$0xff] %v330
        %v332 = vld [vmem:[%s210 + $0x1e0] sm:$0xff]
        %333 = vst [vmem:[%s211 + $0x1e0] sm:$0xff] %v332
        %v334 = vld [vmem:[%s210 + $0x1e8] sm:$0xff]
        %335 = vst [vmem:[%s211 + $0x1e8] sm:$0xff] %v334
        %v336 = vld [vmem:[%s210 + $0x1f0] sm:$0xff]
        %337 = vst [vmem:[%s211 + $0x1f0] sm:$0xff] %v336
        %v338 = vld [vmem:[%s210 + $0x1f8] sm:$0xff]
        %339 = vst [vmem:[%s211 + $0x1f8] sm:$0xff] %v338
      $region59: #{gaussian_point_cloud_scene_forward_pallas.1} parent=53 // loop_footer
        %s209 = sadd.s32 1, %s205
      $region60: #{gaussian_point_cloud_scene_forward_pallas.1} parent=53 // loop_footer_branch
        %204 = sbr.rel target = $region56
      $region61: #{gaussian_point_cloud_scene_forward_pallas.1} parent=53 // loop_exit
        _
    $region54: #{gaussian_point_cloud_scene_forward_pallas.1} parent=38 // pred_fallthru
      _
    %p340 = pneg %p200
    // Predicated region
    $region62: #{gaussian_point_cloud_scene_forward_pallas.1} parent=38 // pred_check
      _
    $region63: #{gaussian_point_cloud_scene_forward_pallas.1} parent=38 // pred_check_branch
      %342 = sbr.rel (%p200) target = $region65
    $region64: #{gaussian_point_cloud_scene_forward_pallas.1} parent=38 // pred_region
      %s343 = sand.u32 512, 7
    $region65: #{gaussian_point_cloud_scene_forward_pallas.1} parent=38 // pred_fallthru
      _
  $region39: #{gaussian_point_cloud_scene_forward_pallas.1} parent=0 // pred_fallthru
    _
  // Predicated region
  $region40: #{gaussian_point_cloud_scene_forward_pallas.1} parent=0 // pred_check
    %p184 = pneg %p180
  $region41: #{gaussian_point_cloud_scene_forward_pallas.1} parent=0 // pred_check_branch
    %186 = sbr.rel (%p184) target = $region43
  $region42: #{gaussian_point_cloud_scene_forward_pallas.1} parent=0 // pred_region
    %s187 = sshll.u32 1, 512
    %s188 = ssub.s32 %s187, 1
    loop: start=0, step=1, limit=1
    $region44: #{gaussian_point_cloud_scene_forward_pallas.1} parent=42 // loop_pre_header
      _
    $region45: #{gaussian_point_cloud_scene_forward_pallas.1} parent=42 // loop_header
      %s190 = sphi 0, %s194
      %p191 = scmp.ge.s32.totalorder %s190, 1
      %s195 = sphi %s1, %s1
      %s196 = sphi %s3, %s3
    $region46: #{gaussian_point_cloud_scene_forward_pallas.1} parent=42 // loop_header_branch
      %193 = sbr.rel (%p191) target = $region50
    $region47: #{gaussian_point_cloud_scene_forward_pallas.1} parent=42 // loop_body
      %v197 = vld [vmem:[%s195] sm:%s188]
      %198 = vst [vmem:[%s196] sm:%s188] %v197
    $region48: #{gaussian_point_cloud_scene_forward_pallas.1} parent=42 // loop_footer
      %s194 = sadd.s32 1, %s190
    $region49: #{gaussian_point_cloud_scene_forward_pallas.1} parent=42 // loop_footer_branch
      %189 = sbr.rel target = $region45
    $region50: #{gaussian_point_cloud_scene_forward_pallas.1} parent=42 // loop_exit
      _
  $region43: #{gaussian_point_cloud_scene_forward_pallas.1} parent=0 // pred_fallthru
    _
  // Predicated region
  $region66: #{gaussian_point_cloud_scene_forward_pallas.1} parent=0 // pred_check
    _
  $region67: #{gaussian_point_cloud_scene_forward_pallas.1} parent=0 // pred_check_branch
    %346 = sbr.rel (0) target = $region69
  $region68: #{gaussian_point_cloud_scene_forward_pallas.1} parent=0 // pred_region
    %347 = vsyncadd %s178, 8192
  $region69: #{gaussian_point_cloud_scene_forward_pallas.1} parent=0 // pred_fallthru
    _
  %s348 = smul.u32 512, 1
  %s349 = sshll.u32 %s348, 4
  %350 = dma.done [#allocation2], %s349
  %s351 = sshll.u32 %s348, 4
  %352 = dma.done %s178, %s351
  %353 = vsyncmov [#allocation2]
  %s354 = vpop.sfrf %353
  %p355 = scmp.eq.s32.totalorder %s354, 0
  %p356 = pneg %p355
  %358 = shalt.err (%p356)
  %s359 = scalar_lea.sflag [#allocation2], 1
  %360 = vsyncmov %s359
  %s361 = vpop.sfrf %360
  %p362 = scmp.eq.s32.totalorder %s361, 0
  %p363 = pneg %p362
  %365 = shalt.err (%p363)

</llo_original>
